<compile_context>
chip_gen: v7x
topology: tpu7x:2x2x1
jax: 0.10.0
libtpu: 0.0.40
codegen_flags: <defaults>
</compile_context>

<pallas_src>
import functools

import jax
import jax.numpy as jnp
from jax.experimental import pallas as pl
from jax.experimental.pallas import tpu as pltpu

# ----------------------------- small config -----------------------------
B = 2                 # batch
ROBERTA_H = 32        # surrogate "roberta" hidden size
NUM_LAYERS = 2        # self.num_layers (12 in the real model)
PREFIX_LEN = 4        # config.prefix_length
HEAD_NUM = 2          # self.head_num  (16 in the real model)
HEAD_DIM = 8          # self.head_dim  (64 in the real model)
FFNN_OUT = NUM_LAYERS * PREFIX_LEN * HEAD_NUM * HEAD_DIM   # 128
D_MODEL = 32          # surrogate BART hidden size
VOCAB = 256           # surrogate vocab (2 vocab tiles -> exercises online softmax)
T_TGT = 7             # target length before EOS/pad shift
T_DEC = T_TGT + 1     # decoder length
EOS_ID = 2
PAD_ID = 1
IGNORE = -100


def _vmem_limit_bytes():
    # ~75% of physical VMEM (pipeline headroom), capped at 96 MiB:
    #   v7x (64 MiB)    -> 48 MiB
    #   v5e/v6e (128 MiB) -> 96 MiB
    # Falls back to a conservative 48 MiB if the query is unavailable.
    try:
        cap = getattr(pltpu.get_tpu_info(), "vmem_capacity_bytes",
                      64 * 1024 * 1024)
    except Exception:  # pragma: no cover - query not available
        cap = 64 * 1024 * 1024
    return int(min(96 * 1024 * 1024, (cap * 3) // 4))


VMEM_LIMIT = _vmem_limit_bytes()


# ----------------------------- kernel 1: prefix FFNN -----------------------------
def ffnn_kernel(x_ref, w_ref, b_ref, o_ref):
    # x: (B, H) bf16   w: (H, TN) bf16   b: (1, TN) f32   o: (B, TN) f32
    o_ref[...] = (
        jnp.dot(x_ref[...], w_ref[...], preferred_element_type=jnp.float32)
        + b_ref[...]
    ).astype(o_ref.dtype)


def ffnn_forward(x, w, b, *, tn=None):
    # x: (B, H) bf16, w: (H, OUT) bf16 (stored bf16 — no call-site cast),
    # b: (1, OUT) f32
    bsz, h = x.shape
    out = w.shape[1]
    if tn is None:
        # GEMV-like (M = B = 2), purely weight-stream bound: wide column tiles
        # minimize per-step overhead. 2048 at real scale (~49K columns -> 24
        # steps); the whole output in one step at toy scale.
        tn = out if out <= 2048 else 2048
        while out % tn != 0:
            tn //= 2
    assert out % tn == 0
    return pl.pallas_call(
        ffnn_kernel,
        out_shape=jax.ShapeDtypeStruct((bsz, out), jnp.float32),
        grid=(out // tn,),
        in_specs=[
            pl.BlockSpec((bsz, h), lambda j: (0, 0)),
            pl.BlockSpec((h, tn), lambda j: (0, j)),
            pl.BlockSpec((1, tn), lambda j: (0, j)),
        ],
        out_specs=pl.BlockSpec((bsz, tn), lambda j: (0, j)),
        compiler_params=pltpu.CompilerParams(
            dimension_semantics=("parallel",),     # independent column tiles
            vmem_limit_bytes=VMEM_LIMIT,
        ),
    )(x, w, b)


# ----------------- kernel 2: vocab-tiled LM head + online-softmax NLL -----------------
def ce_nll_kernel(h_ref, emb_ref, t_ref, nll_ref, m_sc, l_sc):
    # h:   (TR, D)  bf16 — resident across the vocab axis, tiled over rows
    # emb: (TV, D)  bf16 — streamed over the vocab axis
    # t:   (TR, 1)  f32  — precomputed target logit per row (wrapper gather+dot)
    # nll: (TR, 1)  f32  — per-row negative log-likelihood (written on last step)
    # m_sc / l_sc: (TR, 1) f32 VMEM scratch (online-softmax state)
    j = pl.program_id(1)

    @pl.when(j == 0)
    def _init():
        m_sc[...] = jnp.full_like(m_sc, -jnp.inf)
        l_sc[...] = jnp.zeros_like(l_sc)

    # logits = h @ emb_tile.T — contract feature dims on the MXU; no (D, V)
    # transpose is ever materialized in HBM.
    logits = jax.lax.dot_general(
        h_ref[...], emb_ref[...], (((1,), (1,)), ((), ())),
        preferred_element_type=jnp.float32)                        # (TR, TV) f32

    # online softmax (running max / rescaled running sum-exp)
    m_new = jnp.maximum(m_sc[...], jnp.max(logits, axis=-1, keepdims=True))
    alpha = jnp.exp(m_sc[...] - m_new)
    l_sc[...] = alpha * l_sc[...] + jnp.sum(jnp.exp(logits - m_new),
                                            axis=-1, keepdims=True)
    m_sc[...] = m_new

    @pl.when(j == pl.num_programs(1) - 1)
    def _finalize():
        lse = m_sc[...] + jnp.log(l_sc[...])                       # (TR, 1)
        nll_ref[...] = lse - t_ref[...]                            # (TR, 1)


def _pick_v_tile(v):
    # Real scale: ~2048 bf16 columns per tile (fits the ~48 MiB v7x budget with
    # headroom, near-HBM-roofline weight stream on v5e/v6e). Toy scale: two
    # tiles so the online-softmax reduction path is exercised.
    t = 2048 if v >= 4096 else max(v // 2, 128)
    while v % t != 0:
        t //= 2
    return t


def _pick_row_tile(n):
    # Two row tiles (one per TensorCore on v7x) when the split keeps sublane
    # alignment; otherwise a single resident row block.
    half = n // 2
    if n % 2 == 0 and half % 8 == 0:
        return half
    return n


def seq2seq_ce_nll(hidden, emb, tgt_logit, *, v_tile=None, row_tile=None):
    # hidden: (N, D) bf16, emb: (V, D) bf16 (NOT transposed, no call-site cast),
    # tgt_logit: (N, 1) f32 — returns per-row NLL (N, 1) f32.
    n, d = hidden.shape
    v = emb.shape[0]
    if v_tile is None:
        v_tile = _pick_v_tile(v)
    if row_tile is None:
        row_tile = _pick_row_tile(n)
    assert v % v_tile == 0 and n % row_tile == 0
    return pl.pallas_call(
        ce_nll_kernel,
        out_shape=jax.ShapeDtypeStruct((n, 1), jnp.float32),
        grid=(n // row_tile, v // v_tile),
        in_specs=[
            pl.BlockSpec((row_tile, d), lambda i, j: (i, 0)),   # hidden: per-row tile
            pl.BlockSpec((v_tile, d), lambda i, j: (j, 0)),     # emb: streamed over V
            pl.BlockSpec((row_tile, 1), lambda i, j: (i, 0)),   # target logit
        ],
        out_specs=pl.BlockSpec((row_tile, 1), lambda i, j: (i, 0)),
        scratch_shapes=[
            pltpu.VMEM((row_tile, 1), jnp.float32),   # running max
            pltpu.VMEM((row_tile, 1), jnp.float32),   # running sum-exp
        ],
        compiler_params=pltpu.CompilerParams(
            # rows are independent (megacore-shardable on v7x); vocab is the
            # online-softmax reduction axis.
            dimension_semantics=("parallel", "arbitrary"),
            vmem_limit_bytes=VMEM_LIMIT,
        ),
    )(hidden, emb, tgt_logit)


# ----------------------------- model glue (plain JAX) -----------------------------
def init_params(key):
    ks = jax.random.split(key, 3)
    params = {
        # nn.Linear(roberta_hidden, L*P*H*Hd); stored (in, out) in bf16 so the
        # kernel streams it directly (no per-forward f32->bf16 HBM round-trip).
        "ffnn_w": (jax.random.normal(ks[0], (ROBERTA_H, FFNN_OUT), jnp.float32)
                   * 0.02).astype(jnp.bfloat16),
        "ffnn_b": jnp.zeros((1, FFNN_OUT), jnp.float32),
        # surrogate tied embedding / LM head of the BART trunk — kept (V, D),
        # stored bf16 (the dominant weight stream of the CE kernel).
        "emb": (jax.random.normal(ks[1], (VOCAB, D_MODEL), jnp.float32)
                * 0.02).astype(jnp.bfloat16),
        # tiny projection folding the prefix context into decoder states
        "w_prefix": jax.random.normal(ks[2], (HEAD_DIM, D_MODEL), jnp.float32) * 0.02,
    }
    return params


def process_data(target_ids, target_attn):
    # mirrors AMRPrefixGenBase.process_data label construction (BART branch)
    bsz = target_ids.shape[0]
    eos_pad = jnp.full((bsz, 1), EOS_ID, jnp.int32)
    dec_idxs = jnp.concatenate([eos_pad, target_ids], axis=1)
    dec_attn = jnp.concatenate([jnp.ones((bsz, 1), jnp.int32), target_attn], axis=1)
    pad = jnp.full((bsz, 1), PAD_ID, jnp.int32)
    raw_lbl = jnp.concatenate([dec_idxs[:, 1:], pad], axis=1)
    lbl_attn = jnp.concatenate([dec_attn[:, 1:], jnp.zeros((bsz, 1), jnp.int32)], axis=1)
    lbl_idxs = jnp.where(lbl_attn == 0, IGNORE, raw_lbl)
    return dec_idxs, dec_attn, raw_lbl, lbl_idxs


def get_prefix(params, sent_rep):
    # TODO(synk): BioBERT encoder producing sent_rep has no in-script checkpoint;
    # sent_rep is supplied synthetically. The FFNN projection is a Pallas kernel.
    flat = ffnn_forward(sent_rep.astype(jnp.bfloat16),
                        params["ffnn_w"], params["ffnn_b"])
    bsz = sent_rep.shape[0]
    keys = flat.reshape(bsz, NUM_LAYERS, PREFIX_LEN, HEAD_NUM, HEAD_DIM)
    values = keys
    prefix = {
        "encoder_prefix": (keys, values),
        "cross_prefix": (keys, values),
        "decoder_prefix": (keys, values),
    }
    return prefix


@functools.partial(jax.jit, static_argnames=())
def generative_model_forward(params, sent_rep, target_ids, target_attn):
    dec_idxs, dec_attn, _, lbl_idxs = process_data(target_ids, target_attn)
    prefix = get_prefix(params, sent_rep)

    # TODO(synk): full pretrained BART encoder/decoder stack is not reproducible
    # here; a surrogate decoder state (token embedding + prefix context) feeds
    # the Pallas LM-head + cross-entropy kernel, preserving the loss semantics
    # (ignore_index=-100, mean over non-ignored tokens).
    prefix_keys, _ = prefix["decoder_prefix"]
    prefix_ctx = prefix_keys.mean(axis=(1, 2, 3)) @ params["w_prefix"]   # (B, D) f32
    dec_hidden = (params["emb"][dec_idxs].astype(jnp.float32)
                  + prefix_ctx[:, None, :])                              # (B, T, D)
    dec_hidden = dec_hidden * dec_attn[..., None].astype(jnp.float32)

    n = B * T_DEC
    hidden_flat = dec_hidden.reshape(n, D_MODEL).astype(jnp.bfloat16)    # cast once
    labels_flat = lbl_idxs.reshape(n)

    # target-logit term: trivial (N, D) gather + row-dot in the wrapper, so the
    # vocab-streamed kernel needs no per-tile iota / one-hot work.
    lbl_clamped = jnp.maximum(labels_flat, 0)
    tgt_rows = params["emb"][lbl_clamped]                                # (N, D) bf16
    tgt_logit = jnp.einsum("nd,nd->n", hidden_flat, tgt_rows,
                           preferred_element_type=jnp.float32).reshape(n, 1)

    nll = seq2seq_ce_nll(hidden_flat, params["emb"], tgt_logit)          # (N, 1) f32

    # ignore_index=-100 mean reduction (wrapper-side; N-sized, negligible).
    # Note: torch F.cross_entropy yields NaN when every label is ignored; here
    # the max(count, 1) clamp returns 0 instead — intentional divergence.
    valid = (labels_flat != IGNORE).astype(jnp.float32)
    loss = jnp.sum(nll[:, 0] * valid) / jnp.maximum(jnp.sum(valid), 1.0)
    return loss


# ----------------------------- main -----------------------------
if __name__ == "__main__":
    key = jax.random.PRNGKey(0)
    k_param, k_rep, k_tok = jax.random.split(key, 3)

    params = init_params(k_param)

    # synthetic "batch": sentence representation from the (surrogate) RoBERTa CLS,
    # and target token ids / attention mask from the (surrogate) tokenizer.
    sent_rep = jax.random.normal(k_rep, (B, ROBERTA_H), jnp.float32)
    target_ids = jax.random.randint(k_tok, (B, T_TGT), 3, VOCAB, dtype=jnp.int32)
    target_attn = jnp.ones((B, T_TGT), jnp.int32)
    # make the last two target positions of sample 1 padding
    target_attn = target_attn.at[1, -2:].set(0)
    target_ids = jnp.where(target_attn == 0, PAD_ID, target_ids)

    loss = generative_model_forward(params, sent_rep, target_ids, target_attn)
    loss = jax.block_until_ready(loss)
    assert jnp.isfinite(loss), "loss is not finite"
    print("KERNEL_OK")
</pallas_src>

<mosaic_0001>
module attributes {stable_mosaic.version = 11 : i64} {
  func.func @ffnn_kernel(%arg0: i32, %arg1: memref<2x32xbf16, #tpu.memory_space<vmem>>, %arg2: memref<32x128xbf16, #tpu.memory_space<vmem>>, %arg3: memref<1x128xf32, #tpu.memory_space<vmem>>, %arg4: memref<2x128xf32, #tpu.memory_space<vmem>>) attributes {dimension_semantics = [#tpu.dimension_semantics<parallel>], iteration_bounds = array<i64: 1>, scalar_prefetch = 0 : i64, scratch_operands = 0 : i64, tpu.core_type = #tpu.core_type<tc>, window_params = [{pipeline_mode = #tpu.pipeline_mode<synchronous>, transform_indices = @transform_0, window_bounds = array<i64: 2, 32>}, {transform_indices = @transform_1, window_bounds = array<i64: 32, 128>}, {transform_indices = @transform_2, window_bounds = array<i64: 1, 128>}, {transform_indices = @transform_3, window_bounds = array<i64: 2, 128>}]} {
    %c0 = arith.constant 0 : index
    %c0_0 = arith.constant 0 : index
    %0 = vector.load %arg1[%c0, %c0_0] : memref<2x32xbf16, #tpu.memory_space<vmem>>, vector<2x32xbf16>
    %c0_1 = arith.constant 0 : index
    %c0_2 = arith.constant 0 : index
    %1 = vector.load %arg2[%c0_1, %c0_2] : memref<32x128xbf16, #tpu.memory_space<vmem>>, vector<32x128xbf16>
    %cst = arith.constant dense<0.000000e+00> : vector<2x128xf32>
    %2 = tpu.matmul %0, %1, %cst {dimension_numbers = #tpu.dot_dimension_numbers<[1], [0], [0], [1], [0, 0, 1, 1], [], []>} : vector<2x32xbf16>, vector<32x128xbf16>, vector<2x128xf32> -> vector<2x128xf32>
    %c0_3 = arith.constant 0 : index
    %c0_4 = arith.constant 0 : index
    %3 = vector.load %arg3[%c0_3, %c0_4] : memref<1x128xf32, #tpu.memory_space<vmem>>, vector<1x128xf32>
    %4 = vector.broadcast %3 : vector<1x128xf32> to vector<2x128xf32>
    %5 = arith.addf %2, %4 : vector<2x128xf32>
    %c0_5 = arith.constant 0 : index
    %c0_6 = arith.constant 0 : index
    %6 = vector.load %arg4[%c0_5, %c0_6] : memref<2x128xf32, #tpu.memory_space<vmem>>, vector<2x128xf32>
    tpu.vector_store %arg4[%c0_5, %c0_6], %5 {strides = array<i32>} : memref<2x128xf32, #tpu.memory_space<vmem>>, vector<2x128xf32>,
    return
  }
  func.func @transform_0(%arg0: i32) -> (i32, i32) {
    %c0_i32 = arith.constant 0 : i32
    %c0_i32_0 = arith.constant 0 : i32
    %c0_i32_1 = arith.constant 0 : i32
    return %c0_i32, %c0_i32_0 : i32, i32
  }
  func.func @transform_1(%arg0: i32) -> (i32, i32) {
    %c0_i32 = arith.constant 0 : i32
    %c0_i32_0 = arith.constant 0 : i32
    return %c0_i32, %arg0 : i32, i32
  }
  func.func @transform_2(%arg0: i32) -> (i32, i32) {
    %c0_i32 = arith.constant 0 : i32
    %c0_i32_0 = arith.constant 0 : i32
    return %c0_i32, %arg0 : i32, i32
  }
  func.func @transform_3(%arg0: i32) -> (i32, i32) {
    %c0_i32 = arith.constant 0 : i32
    %c0_i32_0 = arith.constant 0 : i32
    return %c0_i32, %arg0 : i32, i32
  }
}

module attributes {stable_mosaic.version = 11 : i64} {
  func.func @ce_nll_kernel(%arg0: i32, %arg1: i32, %arg2: memref<8x32xbf16, #tpu.memory_space<vmem>>, %arg3: memref<128x32xbf16, #tpu.memory_space<vmem>>, %arg4: memref<8x1xf32, #tpu.memory_space<vmem>>, %arg5: memref<8x1xf32, #tpu.memory_space<vmem>>, %arg6: memref<8x1xf32, #tpu.memory_space<vmem>>, %arg7: memref<8x1xf32, #tpu.memory_space<vmem>>) attributes {dimension_semantics = [#tpu.dimension_semantics<parallel>, #tpu.dimension_semantics<arbitrary>], iteration_bounds = array<i64: 2, 2>, scalar_prefetch = 0 : i64, scratch_operands = 2 : i64, tpu.core_type = #tpu.core_type<tc>, window_params = [{transform_indices = @transform_0, window_bounds = array<i64: 8, 32>}, {transform_indices = @transform_1, window_bounds = array<i64: 128, 32>}, {transform_indices = @transform_2, window_bounds = array<i64: 8, 1>}, {transform_indices = @transform_3, window_bounds = array<i64: 8, 1>}]} {
    %c0_i32 = arith.constant 0 : i32
    %0 = arith.cmpi eq, %arg1, %c0_i32 : i32
    %1 = arith.extui %0 : i1 to i32
    %c0_i32_0 = arith.constant 0 : i32
    %2 = arith.cmpi ne, %1, %c0_i32_0 : i32
    scf.if %2 {
      %cst_17 = arith.constant 0xFF800000 : f32
      %26 = vector.broadcast %cst_17 : f32 to vector<8x1xf32>
      %c0_18 = arith.constant 0 : index
      %c0_19 = arith.constant 0 : index
      %27 = vector.load %arg6[%c0_18, %c0_19] : memref<8x1xf32, #tpu.memory_space<vmem>>, vector<8x1xf32>
      tpu.vector_store %arg6[%c0_18, %c0_19], %26 {strides = array<i32>} : memref<8x1xf32, #tpu.memory_space<vmem>>, vector<8x1xf32>,
      %cst_20 = arith.constant 0.000000e+00 : f32
      %28 = vector.broadcast %cst_20 : f32 to vector<8x1xf32>
      %c0_21 = arith.constant 0 : index
      %c0_22 = arith.constant 0 : index
      %29 = vector.load %arg7[%c0_21, %c0_22] : memref<8x1xf32, #tpu.memory_space<vmem>>, vector<8x1xf32>
      tpu.vector_store %arg7[%c0_21, %c0_22], %28 {strides = array<i32>} : memref<8x1xf32, #tpu.memory_space<vmem>>, vector<8x1xf32>,
    } else {
    }
    %c0 = arith.constant 0 : index
    %c0_1 = arith.constant 0 : index
    %3 = vector.load %arg2[%c0, %c0_1] : memref<8x32xbf16, #tpu.memory_space<vmem>>, vector<8x32xbf16>
    %c0_2 = arith.constant 0 : index
    %c0_3 = arith.constant 0 : index
    %4 = vector.load %arg3[%c0_2, %c0_3] : memref<128x32xbf16, #tpu.memory_space<vmem>>, vector<128x32xbf16>
    %cst = arith.constant dense<0.000000e+00> : vector<8x128xf32>
    %5 = tpu.matmul %3, %4, %cst {dimension_numbers = #tpu.dot_dimension_numbers<[1], [1], [0], [0], [0, 0, 1, 0], [], []>} : vector<8x32xbf16>, vector<128x32xbf16>, vector<8x128xf32> -> vector<8x128xf32>
    %c0_4 = arith.constant 0 : index
    %c0_5 = arith.constant 0 : index
    %6 = vector.load %arg6[%c0_4, %c0_5] : memref<8x1xf32, #tpu.memory_space<vmem>>, vector<8x1xf32>
    %cst_6 = arith.constant dense<0xFF800000> : vector<8xf32>
    %7 = vector.multi_reduction <maximumf>, %5, %cst_6 [1] : vector<8x128xf32> to vector<8xf32>
    %8 = vector.shape_cast %7 : vector<8xf32> to vector<8x1xf32>
    %9 = arith.maximumf %6, %8 : vector<8x1xf32>
    %c0_7 = arith.constant 0 : index
    %c0_8 = arith.constant 0 : index
    %10 = vector.load %arg6[%c0_7, %c0_8] : memref<8x1xf32, #tpu.memory_space<vmem>>, vector<8x1xf32>
    %11 = arith.subf %10, %9 : vector<8x1xf32>
    %12 = math.exp %11 : vector<8x1xf32>
    %c0_9 = arith.constant 0 : index
    %c0_10 = arith.constant 0 : index
    %13 = vector.load %arg7[%c0_9, %c0_10] : memref<8x1xf32, #tpu.memory_space<vmem>>, vector<8x1xf32>
    %14 = arith.mulf %12, %13 : vector<8x1xf32>
    %15 = vector.broadcast %9 : vector<8x1xf32> to vector<8x128xf32>
    %16 = arith.subf %5, %15 : vector<8x128xf32>
    %17 = math.exp %16 : vector<8x128xf32>
    %cst_11 = arith.constant dense<0.000000e+00> : vector<8xf32>
    %18 = vector.multi_reduction <add>, %17, %cst_11 [1] : vector<8x128xf32> to vector<8xf32>
    %19 = vector.shape_cast %18 : vector<8xf32> to vector<8x1xf32>
    %20 = arith.addf %14, %19 : vector<8x1xf32>
    %c0_12 = arith.constant 0 : index
    %c0_13 = arith.constant 0 : index
    %21 = vector.load %arg7[%c0_12, %c0_13] : memref<8x1xf32, #tpu.memory_space<vmem>>, vector<8x1xf32>
    tpu.vector_store %arg7[%c0_12, %c0_13], %20 {strides = array<i32>} : memref<8x1xf32, #tpu.memory_space<vmem>>, vector<8x1xf32>,
    %c0_14 = arith.constant 0 : index
    %c0_15 = arith.constant 0 : index
    %22 = vector.load %arg6[%c0_14, %c0_15] : memref<8x1xf32, #tpu.memory_space<vmem>>, vector<8x1xf32>
    tpu.vector_store %arg6[%c0_14, %c0_15], %9 {strides = array<i32>} : memref<8x1xf32, #tpu.memory_space<vmem>>, vector<8x1xf32>,
    %c1_i32 = arith.constant 1 : i32
    %23 = arith.cmpi eq, %arg1, %c1_i32 : i32
    %24 = arith.extui %23 : i1 to i32
    %c0_i32_16 = arith.constant 0 : i32
    %25 = arith.cmpi ne, %24, %c0_i32_16 : i32
    scf.if %25 {
      %c0_17 = arith.constant 0 : index
      %c0_18 = arith.constant 0 : index
      %26 = vector.load %arg6[%c0_17, %c0_18] : memref<8x1xf32, #tpu.memory_space<vmem>>, vector<8x1xf32>
      %c0_19 = arith.constant 0 : index
      %c0_20 = arith.constant 0 : index
      %27 = vector.load %arg7[%c0_19, %c0_20] : memref<8x1xf32, #tpu.memory_space<vmem>>, vector<8x1xf32>
      %28 = math.log %27 : vector<8x1xf32>
      %29 = arith.addf %26, %28 : vector<8x1xf32>
      %c0_21 = arith.constant 0 : index
      %c0_22 = arith.constant 0 : index
      %30 = vector.load %arg4[%c0_21, %c0_22] : memref<8x1xf32, #tpu.memory_space<vmem>>, vector<8x1xf32>
      %31 = arith.subf %29, %30 : vector<8x1xf32>
      %c0_23 = arith.constant 0 : index
      %c0_24 = arith.constant 0 : index
      %32 = vector.load %arg5[%c0_23, %c0_24] : memref<8x1xf32, #tpu.memory_space<vmem>>, vector<8x1xf32>
      tpu.vector_store %arg5[%c0_23, %c0_24], %31 {strides = array<i32>} : memref<8x1xf32, #tpu.memory_space<vmem>>, vector<8x1xf32>,
    } else {
    }
    return
  }
  func.func @transform_0(%arg0: i32, %arg1: i32) -> (i32, i32) {
    %c0_i32 = arith.constant 0 : i32
    %c0_i32_0 = arith.constant 0 : i32
    return %arg0, %c0_i32 : i32, i32
  }
  func.func @transform_1(%arg0: i32, %arg1: i32) -> (i32, i32) {
    %c0_i32 = arith.constant 0 : i32
    %c0_i32_0 = arith.constant 0 : i32
    return %arg1, %c0_i32 : i32, i32
  }
  func.func @transform_2(%arg0: i32, %arg1: i32) -> (i32, i32) {
    %c0_i32 = arith.constant 0 : i32
    %c0_i32_0 = arith.constant 0 : i32
    return %arg0, %c0_i32 : i32, i32
  }
  func.func @transform_3(%arg0: i32, %arg1: i32) -> (i32, i32) {
    %c0_i32 = arith.constant 0 : i32
    %c0_i32_0 = arith.constant 0 : i32
    return %arg0, %c0_i32 : i32, i32
  }
}

</mosaic_0001>

<llo_original>
// kernel: generative_model_forward.2
$region0: #{generative_model_forward.2}
  #allocation0 [shape = 'u32[]', space=smem, size = 0x4, offset = 0x4, fixed_abs, tag = 'smem constant byte address 0x4 - core index']
  #allocation1 [shape = 'u32[144,128]{1,0:T(1,128)}', space=vmem, size = 0x12000, scoped, tag = 'internal scratch']
  %s0 = inlined_call_operand.vmem [shape: bf16[2,32], index: 0, kind: input, shape index: {}]
  %s1 = inlined_call_operand.hbm [shape: bf16[32,128], index: 1, kind: input, shape index: {}]
  %s2 = inlined_call_operand.vmem [shape: f32[1,128], index: 2, kind: input, shape index: {}]
  %s3 = inlined_call_operand.vmem [shape: f32[2,128], index: 3, kind: output, shape index: {}]
  %s4 = sld [smem:[#allocation0]]
  $region26: #{generative_model_forward.2} parent=0
    _
  %s6 = ssub.s32 1, %s4
  %s7 = scalar_select 0, %s6, %s4
  $region1: #{generative_model_forward.2} parent=0
    #allocation2 [shape = 'u8[8192]{0}', space=vmem, size = 0x2000, scoped, tag = 'input window, operand 1, single buffered']
    #allocation3 [shape = 's32[1]{0}', space=sflag, size = 0x4, scoped, tag = 'scoped memory for generative_model_forward.2']
    %8 = vsyncpa [#allocation3], 0
    // Predicated region
    $region2: #{generative_model_forward.2} parent=1 // pred_check
      _
    $region3: #{generative_model_forward.2} parent=1 // pred_check_branch
      %10 = sbr.rel (0) target = $region5
    $region4: #{generative_model_forward.2} parent=1 // pred_region
      _
    $region5: #{generative_model_forward.2} parent=1 // pred_fallthru
      _
    // Predicated region
    $region6: #{generative_model_forward.2} parent=1 // pred_check
      _
    $region7: #{generative_model_forward.2} parent=1 // pred_check_branch
      %12 = sbr.rel (0) target = $region9
    $region8: #{generative_model_forward.2} parent=1 // pred_region
      %s14 = ssub.s32 256, 256
      %15 = vsyncadd [#allocation3], %s14
      %s16 = sshll.u32 [#allocation2], 4
      %s17 = int_to_ptr.vmem [resolvable:$true] %s16
      %22 = dma.hbm_to_vmem [thread:$0]  %s1, 256, %s17, [#allocation3], 64, 64, 4
    $region9: #{generative_model_forward.2} parent=1 // pred_fallthru
      _
    // Predicated region
    $region10: #{generative_model_forward.2} parent=1 // pred_check
      _
    $region11: #{generative_model_forward.2} parent=1 // pred_check_branch
      %24 = sbr.rel (0) target = $region13
    $region12: #{generative_model_forward.2} parent=1 // pred_region
      _
    $region13: #{generative_model_forward.2} parent=1 // pred_fallthru
      _
    // Predicated region
    $region14: #{generative_model_forward.2} parent=1 // pred_check
      _
    $region15: #{generative_model_forward.2} parent=1 // pred_check_branch
      %26 = sbr.rel (0) target = $region17
    $region16: #{generative_model_forward.2} parent=1 // pred_region
      %27 = dma.done [#allocation3], 256
    $region17: #{generative_model_forward.2} parent=1 // pred_fallthru
      _
    %v29 = vld [vmem:[%s0] sm:$0x1]
    %v30 = vld [vmem:[#allocation2] sm:$0xf]
    %v31 = vld [vmem:[#allocation2 + $0x4] sm:$0xf]
    %v32 = vld [vmem:[#allocation2 + $0x8] sm:$0xf]
    %v33 = vld [vmem:[#allocation2 + $0xc] sm:$0xf]
    %v34 = vld [vmem:[%s2] sm:$0x1]
    %v36 = vlaneseq
    %v37 = vshrl.u32 %v36, 7
    %v38 = vsub.s32 0, %v37
    %v39 = vrot.slane %v34, %v38
    %v45 = vunpack.c.l.b16 %v30
    %v46 = vunpack.c.l.b16 %v31
    %v47 = vunpack.c.l.b16 %v32
    %v48 = vunpack.c.l.b16 %v33
    %v49 = vpack.c.b16 %v46, %v45
    %v50 = vpack.c.b16 %v48, %v47
    %vm53 = vcmask 261120
    %v55 = vsel %vm53, %v29, 0
    %57 = vmatprep.subr.bf16.mxu0 0
    %58 = vmatpush1.bf16.msra.mxu0 %v49
    %59 = vmatprep.subr.bf16.mxu0 0
    %60 = vmatpush1.bf16.msra.mxu0 %v50
    %61 = vmatprep.subr.bf16.mxu0 0
    %62 = vmatpush1.bf16.msra.mxu0 0
    %63 = vmatprep.subr.bf16.mxu0 0
    %64 = vmatpush1.bf16.msra.mxu0 0
    %65 = vmatprep.subr.bf16.mxu0 0
    %66 = vmatpush1.bf16.msra.mxu0 0
    %67 = vmatprep.subr.bf16.mxu0 0
    %68 = vmatpush1.bf16.msra.mxu0 0
    %69 = vmatprep.subr.bf16.mxu0 0
    %70 = vmatpush1.bf16.msra.mxu0 0
    %71 = vmatprep.subr.bf16.mxu0 0
    %72 = vmatpush1.bf16.msra.mxu0 0
    %73 = vmatprep.subr.bf16.mxu0 0
    %74 = vmatpush1.bf16.msra.mxu0 0
    %75 = vmatprep.subr.bf16.mxu0 0
    %76 = vmatpush1.bf16.msra.mxu0 0
    %77 = vmatprep.subr.bf16.mxu0 0
    %78 = vmatpush1.bf16.msra.mxu0 0
    %79 = vmatprep.subr.bf16.mxu0 0
    %80 = vmatpush1.bf16.msra.mxu0 0
    %81 = vmatprep.subr.bf16.mxu0 0
    %82 = vmatpush1.bf16.msra.mxu0 0
    %83 = vmatprep.subr.bf16.mxu0 0
    %84 = vmatpush1.bf16.msra.mxu0 0
    %85 = vmatprep.subr.bf16.mxu0 0
    %86 = vmatpush1.bf16.msra.mxu0 0
    %87 = vmatprep.subr.bf16.mxu0 0
    %88 = vmatpush1.bf16.msra.mxu0 0
    %89 = vmatprep.mubr.bf16.mxu0 0
    %90 = vmatmul.mubr.bf16.gmra.mrb[0].mxu0 %v55
    %v91 = vpop.f32.mrb[0].mxu0
    %v92 = vadd.f32 %v39, %v91
    %v93 = vpop.f32.mrb[0].mxu0
    %v94 = vpop.f32.mrb[0].mxu0
    %v95 = vpop.f32.mrb[0].mxu0
    %96 = vdwg.mxu0
    %97 = vst [vmem:[%s3] sm:$0x3] %v92
    // Predicated region
    $region18: #{generative_model_forward.2} parent=1 // pred_check
      _
    $region19: #{generative_model_forward.2} parent=1 // pred_check_branch
      %99 = sbr.rel (0) target = $region21
    $region20: #{generative_model_forward.2} parent=1 // pred_region
      _
    $region21: #{generative_model_forward.2} parent=1 // pred_fallthru
      _
    // Predicated region
    $region22: #{generative_model_forward.2} parent=1 // pred_check
      _
    $region23: #{generative_model_forward.2} parent=1 // pred_check_branch
      %101 = sbr.rel (0) target = $region25
    $region24: #{generative_model_forward.2} parent=1 // pred_region
      _
    $region25: #{generative_model_forward.2} parent=1 // pred_fallthru
      _
    %102 = vsyncpa [#allocation3], 1

// kernel: generative_model_forward.3
$region0: #{generative_model_forward.3}
  #allocation0 [shape = 'u32[]', space=smem, size = 0x4, offset = 0x4, fixed_abs, tag = 'smem constant byte address 0x4 - core index']
  #allocation1 [shape = 'u32[144,128]{1,0:T(1,128)}', space=vmem, size = 0x12000, scoped, tag = 'internal scratch']
  #allocation2 [shape = 'f32[8,1]{1,0:T(8,128)}', space=vmem, size = 0x1000, scoped, tag = 'scratch operand']
  #allocation3 [shape = 'f32[8,1]{1,0:T(8,128)}', space=vmem, size = 0x1000, scoped, tag = 'scratch operand']
  %s0 = inlined_call_operand.vmem [shape: bf16[16,32], index: 0, kind: input, shape index: {}]
  %s1 = inlined_call_operand.vmem [shape: bf16[256,32], index: 1, kind: input, shape index: {}]
  %s2 = inlined_call_operand.vmem [shape: f32[16,1], index: 2, kind: input, shape index: {}]
  %s3 = inlined_call_operand.vmem [shape: f32[16,1], index: 3, kind: output, shape index: {}]
  %s4 = sld [smem:[#allocation0]]
  $region53: #{generative_model_forward.3} parent=0
    _
  %s6 = ssub.s32 1, %s4
  %s7 = scalar_select 0, %s6, %s4
  loop: start=0, step=1, limit=6
  $region2: #{generative_model_forward.3} parent=0 // loop_pre_header
    _
  $region3: #{generative_model_forward.3} parent=0 // loop_header
    %s9 = sphi 0, %s13
    %p10 = scmp.ge.s32.totalorder %s9, 6
    %s16 = sphi 0, %s28
    %s17 = sphi 0, %s24
    %s18 = sphi 0, %s16
    %s19 = sphi 0, %s17
    %s20 = sphi 0, %s18
    %s21 = sphi 0, %s19
    %s31 = sphi 0, %s33
    %s34 = sphi 0, %s31
    %s35 = sphi 0, %s34
    %s51 = sphi 0, %s35
    %s57 = sphi 0, %s59
    %s60 = sphi 0, %s57
    %s61 = sphi 0, %s60
    %s77 = sphi 0, %s61
    %s83 = sphi 0, %s85
    %s86 = sphi 0, %s83
    %s87 = sphi 0, %s86
    %s103 = sphi 0, %s87
    %s109 = sphi 0, %s111
    %s112 = sphi 0, %s109
    %s113 = sphi 0, %s112
    %s129 = sphi 0, %s113
  $region4: #{generative_model_forward.3} parent=0 // loop_header_branch
    %12 = sbr.rel (%p10) target = $region8
  $region5: #{generative_model_forward.3} parent=0 // loop_body
    %s14 = ssub.s32 %s9, 1
    %s15 = ssub.s32 %s9, 2
    %s22 = sadd.s32 1, %s17
    %p23 = scmp.ge.s32.totalorder %s22, 2
    %s24 = scalar_select %p23, 0, %s22
    %s25 = sadd.s32 1, %s16
    %s26 = scalar_select %p23, %s25, %s16
    %p27 = scmp.ge.s32.totalorder %s26, 2
    %s28 = scalar_select %p27, 0, %s26
    %s29 = ssub.s32 %s16, %s28
    %p30 = scmp.eq.s32.totalorder %s29, 0
    %s32 = sadd.s32 %s31, 1
    %s33 = scalar_select %p30, %s31, %s32
    %p36 = pneg %p30
    %p37 = scmp.eq.s32.totalorder %s9, 3
    %p38 = por %p36, %p37
    %p39 = scmp.ne.s32.totalorder %s31, %s34
    %p40 = scmp.eq.s32.totalorder %s9, 0
    %p41 = por %p39, %p40
    %p42 = scmp.ne.s32.totalorder %s31, %s34
    %p43 = scmp.eq.s32.totalorder %s14, 3
    %p44 = por %p42, %p43
    %p45 = scmp.ne.s32.totalorder %s34, %s35
    %p46 = scmp.eq.s32.totalorder %s14, 0
    %p47 = por %p45, %p46
    %p48 = scmp.ne.s32.totalorder %s34, %s35
    %p49 = scmp.eq.s32.totalorder %s15, 3
    %p50 = por %p48, %p49
    %p52 = scmp.ne.s32.totalorder %s35, %s51
    %p53 = scmp.eq.s32.totalorder %s15, 0
    %p54 = por %p52, %p53
    %s55 = ssub.s32 %s17, %s24
    %p56 = scmp.eq.s32.totalorder %s55, 0
    %s58 = sadd.s32 %s57, 1
    %s59 = scalar_select %p56, %s57, %s58
    %p62 = pneg %p56
    %p63 = scmp.eq.s32.totalorder %s9, 3
    %p64 = por %p62, %p63
    %p65 = scmp.ne.s32.totalorder %s57, %s60
    %p66 = scmp.eq.s32.totalorder %s9, 0
    %p67 = por %p65, %p66
    %p68 = scmp.ne.s32.totalorder %s57, %s60
    %p69 = scmp.eq.s32.totalorder %s14, 3
    %p70 = por %p68, %p69
    %p71 = scmp.ne.s32.totalorder %s60, %s61
    %p72 = scmp.eq.s32.totalorder %s14, 0
    %p73 = por %p71, %p72
    %p74 = scmp.ne.s32.totalorder %s60, %s61
    %p75 = scmp.eq.s32.totalorder %s15, 3
    %p76 = por %p74, %p75
    %p78 = scmp.ne.s32.totalorder %s61, %s77
    %p79 = scmp.eq.s32.totalorder %s15, 0
    %p80 = por %p78, %p79
    %s81 = ssub.s32 %s16, %s28
    %p82 = scmp.eq.s32.totalorder %s81, 0
    %s84 = sadd.s32 %s83, 1
    %s85 = scalar_select %p82, %s83, %s84
    %p88 = pneg %p82
    %p89 = scmp.eq.s32.totalorder %s9, 3
    %p90 = por %p88, %p89
    %p91 = scmp.ne.s32.totalorder %s83, %s86
    %p92 = scmp.eq.s32.totalorder %s9, 0
    %p93 = por %p91, %p92
    %p94 = scmp.ne.s32.totalorder %s83, %s86
    %p95 = scmp.eq.s32.totalorder %s14, 3
    %p96 = por %p94, %p95
    %p97 = scmp.ne.s32.totalorder %s86, %s87
    %p98 = scmp.eq.s32.totalorder %s14, 0
    %p99 = por %p97, %p98
    %p100 = scmp.ne.s32.totalorder %s86, %s87
    %p101 = scmp.eq.s32.totalorder %s15, 3
    %p102 = por %p100, %p101
    %p104 = scmp.ne.s32.totalorder %s87, %s103
    %p105 = scmp.eq.s32.totalorder %s15, 0
    %p106 = por %p104, %p105
    %s107 = ssub.s32 %s16, %s28
    %p108 = scmp.eq.s32.totalorder %s107, 0
    %s110 = sadd.s32 %s109, 1
    %s111 = scalar_select %p108, %s109, %s110
    %p114 = pneg %p108
    %p115 = scmp.eq.s32.totalorder %s9, 3
    %p116 = por %p114, %p115
    %p117 = scmp.ne.s32.totalorder %s109, %s112
    %p118 = scmp.eq.s32.totalorder %s9, 0
    %p119 = por %p117, %p118
    %p120 = scmp.ne.s32.totalorder %s109, %s112
    %p121 = scmp.eq.s32.totalorder %s14, 3
    %p122 = por %p120, %p121
    %p123 = scmp.ne.s32.totalorder %s112, %s113
    %p124 = scmp.eq.s32.totalorder %s14, 0
    %p125 = por %p123, %p124
    %p126 = scmp.ne.s32.totalorder %s112, %s113
    %p127 = scmp.eq.s32.totalorder %s15, 3
    %p128 = por %p126, %p127
    %p130 = scmp.ne.s32.totalorder %s113, %s129
    %p131 = scmp.eq.s32.totalorder %s15, 0
    %p132 = por %p130, %p131
    %p133 = scmp.le.s32.totalorder 1, %s9
    %p134 = scmp.lt.s32.totalorder %s9, 5
    %p135 = pnand %p133, %p134
    %p136 = pneg %p135
    // Predicated region
    $region9: #{generative_model_forward.3} parent=5 // pred_check
      _
    $region10: #{generative_model_forward.3} parent=5 // pred_check_branch
      %138 = sbr.rel (%p135) target = $region12
    $region11: #{generative_model_forward.3} parent=5 // pred_region
      %s139 = ssub.s32 %s9, 1
    $region12: #{generative_model_forward.3} parent=5 // pred_fallthru
      _
    %p140 = scmp.lt.s32.totalorder %s9, 4
    // Predicated region
    $region13: #{generative_model_forward.3} parent=5 // pred_check
      %p141 = pneg %p140
    $region14: #{generative_model_forward.3} parent=5 // pred_check_branch
      %143 = sbr.rel (%p141) target = $region16
    $region15: #{generative_model_forward.3} parent=5 // pred_region
      // Predicated region
      $region17: #{generative_model_forward.3} parent=15 // pred_check
        %p144 = pneg %p41
      $region18: #{generative_model_forward.3} parent=15 // pred_check_branch
        %146 = sbr.rel (%p144) target = $region20
      $region19: #{generative_model_forward.3} parent=15 // pred_region
        %p147 = scmp.lt.s32.totalorder %s16, 1
        %s148 = scalar_select %p147, %s16, 1
        %s149 = smul.addr %s148, 4
        %s150 = scalar_lea.vmem %s0, %s149
      $region20: #{generative_model_forward.3} parent=15 // pred_fallthru
        _
      // Predicated region
      $region21: #{generative_model_forward.3} parent=15 // pred_check
        %p151 = pneg %p67
      $region22: #{generative_model_forward.3} parent=15 // pred_check_branch
        %153 = sbr.rel (%p151) target = $region24
      $region23: #{generative_model_forward.3} parent=15 // pred_region
        %s154 = smul.u32 16, %s17
        %p155 = scmp.lt.s32.totalorder %s154, 31
        %s156 = scalar_select %p155, %s154, 31
        %s157 = smul.addr %s156, 4
        %s158 = scalar_lea.vmem %s1, %s157
        %s159 = smul.u32 16, %s17
      $region24: #{generative_model_forward.3} parent=15 // pred_fallthru
        _
      // Predicated region
      $region25: #{generative_model_forward.3} parent=15 // pred_check
        %p160 = pneg %p93
      $region26: #{generative_model_forward.3} parent=15 // pred_check_branch
        %162 = sbr.rel (%p160) target = $region28
      $region27: #{generative_model_forward.3} parent=15 // pred_region
        %p163 = scmp.lt.s32.totalorder %s16, 1
        %s164 = scalar_select %p163, %s16, 1
        %s165 = smul.addr %s164, 8
        %s166 = scalar_lea.vmem %s2, %s165
      $region28: #{generative_model_forward.3} parent=15 // pred_fallthru
        _
    $region16: #{generative_model_forward.3} parent=5 // pred_fallthru
      _
    %p167 = scmp.le.s32.totalorder 1, %s9
    %p168 = scmp.lt.s32.totalorder %s9, 5
    %p169 = pnand %p167, %p168
    %p170 = pneg %p169
    // Predicated region
    $region29: #{generative_model_forward.3} parent=5 // pred_check
      _
    $region30: #{generative_model_forward.3} parent=5 // pred_check_branch
      %172 = sbr.rel (%p169) target = $region32
    $region31: #{generative_model_forward.3} parent=5 // pred_region
      %s173 = ssub.s32 %s9, 1
      %p174 = scmp.lt.s32.totalorder %s18, 1
      %s175 = scalar_select %p174, %s18, 1
      %s176 = smul.addr %s175, 4
      %s177 = scalar_lea.vmem %s0, %s176
      %p178 = pneg %p47
      %p179 = pneg %p44
      %s180 = smul.u32 16, %s19
      %p181 = scmp.lt.s32.totalorder %s180, 31
      %s182 = scalar_select %p181, %s180, 31
      %s183 = smul.addr %s182, 4
      %s184 = scalar_lea.vmem %s1, %s183
      %p185 = pneg %p73
      %p186 = pneg %p70
      %p187 = scmp.lt.s32.totalorder %s18, 1
      %s188 = scalar_select %p187, %s18, 1
      %s189 = smul.addr %s188, 8
      %s190 = scalar_lea.vmem %s2, %s189
      %p191 = pneg %p99
      %p192 = pneg %p96
      %p193 = pneg %p125
      %p194 = pneg %p122
      %p195 = scmp.lt.s32.totalorder %s18, 1
      %s196 = scalar_select %p195, %s18, 1
      %s197 = smul.addr %s196, 8
      %s198 = scalar_lea.vmem %s3, %s197
      %p199 = scmp.lt.s32.totalorder %s18, 1
      %s200 = scalar_select %p199, %s18, 1
      %s201 = smul.addr %s200, 4
      %s202 = scalar_lea.vmem %s0, %s201
      %s203 = smul.u32 16, %s19
      %p204 = scmp.lt.s32.totalorder %s203, 31
      %s205 = scalar_select %p204, %s203, 31
      %s206 = smul.addr %s205, 4
      %s207 = scalar_lea.vmem %s1, %s206
      %s208 = smul.u32 16, %s19
      %p209 = scmp.lt.s32.totalorder %s18, 1
      %s210 = scalar_select %p209, %s18, 1
      %s211 = smul.addr %s210, 8
      %s212 = scalar_lea.vmem %s2, %s211
      %p213 = scmp.lt.s32.totalorder %s18, 1
      %s214 = scalar_select %p213, %s18, 1
      %s215 = smul.addr %s214, 8
      %s216 = scalar_lea.vmem %s3, %s215
      %p218 = scmp.eq.s32.totalorder %s19, 0
      // Predicated region
      $region33: #{generative_model_forward.3} parent=31 // pred_check
        %p219 = pneg %p218
      $region34: #{generative_model_forward.3} parent=31 // pred_check_branch
        %221 = sbr.rel (%p219) target = $region36
      $region35: #{generative_model_forward.3} parent=31 // pred_region
        %vm222 = vcmask 7168
        %223 = vst.msk [vmem:[#allocation2] sm:$0xff] %vm222, -inf
        %224 = vst.msk [vmem:[#allocation3] sm:$0xff] %vm222, 0.0
      $region36: #{generative_model_forward.3} parent=31 // pred_fallthru
        _
      %v225 = vld [vmem:[%s202] sm:$0xf]
      %v226 = vld [vmem:[%s207] sm:$0xf]
      %v227 = vld [vmem:[%s207 + $0x4] sm:$0xf]
      %v228 = vld [vmem:[%s207 + $0x8] sm:$0xf]
      %v229 = vld [vmem:[%s207 + $0xc] sm:$0xf]
      %v230 = vld [vmem:[%s207 + $0x10] sm:$0xf]
      %v231 = vld [vmem:[%s207 + $0x14] sm:$0xf]
      %v232 = vld [vmem:[%s207 + $0x18] sm:$0xf]
      %v233 = vld [vmem:[%s207 + $0x1c] sm:$0xf]
      %v234 = vld [vmem:[%s207 + $0x20] sm:$0xf]
      %v235 = vld [vmem:[%s207 + $0x24] sm:$0xf]
      %v236 = vld [vmem:[%s207 + $0x28] sm:$0xf]
      %v237 = vld [vmem:[%s207 + $0x2c] sm:$0xf]
      %v238 = vld [vmem:[%s207 + $0x30] sm:$0xf]
      %v239 = vld [vmem:[%s207 + $0x34] sm:$0xf]
      %v240 = vld [vmem:[%s207 + $0x38] sm:$0xf]
      %v241 = vld [vmem:[%s207 + $0x3c] sm:$0xf]
      %v258 = vunpack.c.l.b16 %v226
      %v259 = vunpack.c.l.b16 %v227
      %v260 = vunpack.c.l.b16 %v228
      %v261 = vunpack.c.l.b16 %v229
      %v262 = vunpack.c.l.b16 %v230
      %v263 = vunpack.c.l.b16 %v231
      %v264 = vunpack.c.l.b16 %v232
      %v265 = vunpack.c.l.b16 %v233
      %v266 = vunpack.c.l.b16 %v234
      %v267 = vunpack.c.l.b16 %v235
      %v268 = vunpack.c.l.b16 %v236
      %v269 = vunpack.c.l.b16 %v237
      %v270 = vunpack.c.l.b16 %v238
      %v271 = vunpack.c.l.b16 %v239
      %v272 = vunpack.c.l.b16 %v240
      %v273 = vunpack.c.l.b16 %v241
      %v274 = vpack.c.b16 %v259, %v258
      %v275 = vpack.c.b16 %v261, %v260
      %v276 = vpack.c.b16 %v263, %v262
      %v277 = vpack.c.b16 %v265, %v264
      %v278 = vpack.c.b16 %v267, %v266
      %v279 = vpack.c.b16 %v269, %v268
      %v280 = vpack.c.b16 %v271, %v270
      %v281 = vpack.c.b16 %v273, %v272
      %vm282 = vcmask 261120
      %v284 = vsel %vm282, %v225, 0
      %v287 = vsel %vm282, %v274, 0
      %v290 = vsel %vm282, %v275, 0
      %v293 = vsel %vm282, %v276, 0
      %v296 = vsel %vm282, %v277, 0
      %v299 = vsel %vm282, %v278, 0
      %v302 = vsel %vm282, %v279, 0
      %v305 = vsel %vm282, %v280, 0
      %v308 = vsel %vm282, %v281, 0
      %310 = vmatprep.subr.bf16.mxu0 0
      %311 = vmatpush1.bf16.xpose.msra.mxu0 %v287
      %312 = vmatprep.subr.bf16.mxu0 0
      %313 = vmatpush1.bf16.xpose.msra.mxu0 %v290
      %314 = vmatprep.subr.bf16.mxu0 0
      %315 = vmatpush1.bf16.xpose.msra.mxu0 %v293
      %316 = vmatprep.subr.bf16.mxu0 0
      %317 = vmatpush1.bf16.xpose.msra.mxu0 %v296
      %318 = vmatprep.subr.bf16.mxu0 0
      %319 = vmatpush1.bf16.xpose.msra.mxu0 %v299
      %320 = vmatprep.subr.bf16.mxu0 0
      %321 = vmatpush1.bf16.xpose.msra.mxu0 %v302
      %322 = vmatprep.subr.bf16.mxu0 0
      %323 = vmatpush1.bf16.xpose.msra.mxu0 %v305
      %324 = vmatprep.subr.bf16.mxu0 0
      %325 = vmatpush1.bf16.xpose.msra.mxu0 %v308
      %326 = vmatprep.subr.bf16.mxu0 0
      %327 = vmatpush1.bf16.xpose.msra.mxu0 0
      %328 = vmatprep.subr.bf16.mxu0 0
      %329 = vmatpush1.bf16.xpose.msra.mxu0 0
      %330 = vmatprep.subr.bf16.mxu0 0
      %331 = vmatpush1.bf16.xpose.msra.mxu0 0
      %332 = vmatprep.subr.bf16.mxu0 0
      %333 = vmatpush1.bf16.xpose.msra.mxu0 0
      %334 = vmatprep.subr.bf16.mxu0 0
      %335 = vmatpush1.bf16.xpose.msra.mxu0 0
      %336 = vmatprep.subr.bf16.mxu0 0
      %337 = vmatpush1.bf16.xpose.msra.mxu0 0
      %338 = vmatprep.subr.bf16.mxu0 0
      %339 = vmatpush1.bf16.xpose.msra.mxu0 0
      %340 = vmatprep.subr.bf16.mxu0 0
      %341 = vmatpush1.bf16.xpose.msra.mxu0 0
      %342 = vmatprep.mubr.bf16.mxu0 0
      %343 = vmatmul.mubr.bf16.gmra.mrb[0].mxu0 %v284
      %v344 = vpop.f32.mrb[0].mxu0
      %v345 = vadd.f32 0.0, %v344
      %v346 = vpop.f32.mrb[0].mxu0
      %v347 = vpop.f32.mrb[0].mxu0
      %v348 = vpop.f32.mrb[0].mxu0
      %349 = vdwg.mxu0
      %v350 = vld [vmem:[#allocation2] sm:$0xff]
      %351 = vmax.xlane.f32.xlu0 %v345
      %v352 = vpop.xlane.xlu0 %351
      %v353 = vmax.f32 %v350, %v352
      %v354 = vsub.f32 %v350, %v353
      %v355 = vmul.f32 %v354, 1.442695
      %v356 = vpow.pop %v355
      %v357 = vld [vmem:[#allocation3] sm:$0xff]
      %v358 = vmul.f32 %v356, %v357
      %360 = vset.pattern.permute.xlu0 0
      %361 = vperm.xlu0 %360, %v353
      %v362 = vpop.permute.xlu0 %361
      %v364 = vsub.f32 %v345, %v362
      %v365 = vmul.f32 %v364, 1.442695
      %v366 = vpow.pop %v365
      %367 = vadd.xlane.f32.xlu0 %v366
      %v368 = vpop.xlane.xlu0 %367
      %v369 = vadd.f32 %v358, %v368
      %vm370 = vcmask 7168
      %371 = vst.msk [vmem:[#allocation3] sm:$0xff] %vm370, %v369
      %372 = vst.msk [vmem:[#allocation2] sm:$0xff] %vm370, %v353
      %p373 = scmp.eq.s32.totalorder %s19, 1
      // Predicated region
      $region37: #{generative_model_forward.3} parent=31 // pred_check
        %p374 = pneg %p373
      $region38: #{generative_model_forward.3} parent=31 // pred_check_branch
        %376 = sbr.rel (%p374) target = $region40
      $region39: #{generative_model_forward.3} parent=31 // pred_region
        %v377 = vld [vmem:[#allocation2] sm:$0xff]
        %v378 = vld [vmem:[#allocation3] sm:$0xff]
        %v379 = vlog2.pop %v378
        %v380 = vmul.f32 %v379, 0.6931472
        %v381 = vadd.f32 %v377, %v380
        %v382 = vld [vmem:[%s212] sm:$0xff]
        %v383 = vsub.f32 %v381, %v382
        %384 = vst.msk [vmem:[%s216] sm:$0xff] %vm370, %v383
      $region40: #{generative_model_forward.3} parent=31 // pred_fallthru
        _
      %p385 = scmp.lt.s32.totalorder %s18, 1
      %s386 = scalar_select %p385, %s18, 1
      %s387 = smul.addr %s386, 8
      %s388 = scalar_lea.vmem %s3, %s387
      // Predicated region
      $region41: #{generative_model_forward.3} parent=31 // pred_check
        %p389 = pneg %p122
      $region42: #{generative_model_forward.3} parent=31 // pred_check_branch
        %391 = sbr.rel (%p389) target = $region44
      $region43: #{generative_model_forward.3} parent=31 // pred_region
        _
      $region44: #{generative_model_forward.3} parent=31 // pred_fallthru
        _
    $region32: #{generative_model_forward.3} parent=5 // pred_fallthru
      _
    %p392 = scmp.le.s32.totalorder 2, %s9
    // Predicated region
    $region45: #{generative_model_forward.3} parent=5 // pred_check
      %p393 = pneg %p392
    $region46: #{generative_model_forward.3} parent=5 // pred_check_branch
      %395 = sbr.rel (%p393) target = $region48
    $region47: #{generative_model_forward.3} parent=5 // pred_region
      %s396 = ssub.s32 %s9, 2
      // Predicated region
      $region49: #{generative_model_forward.3} parent=47 // pred_check
        %p397 = pneg %p128
      $region50: #{generative_model_forward.3} parent=47 // pred_check_branch
        %399 = sbr.rel (%p397) target = $region52
      $region51: #{generative_model_forward.3} parent=47 // pred_region
        %p400 = scmp.lt.s32.totalorder %s20, 1
        %s401 = scalar_select %p400, %s20, 1
        %s402 = smul.addr %s401, 8
        %s403 = scalar_lea.vmem %s3, %s402
      $region52: #{generative_model_forward.3} parent=47 // pred_fallthru
        _
    $region48: #{generative_model_forward.3} parent=5 // pred_fallthru
      _
  $region6: #{generative_model_forward.3} parent=0 // loop_footer
    %s13 = sadd.s32 1, %s9
  $region7: #{generative_model_forward.3} parent=0 // loop_footer_branch
    %8 = sbr.rel target = $region3
  $region8: #{generative_model_forward.3} parent=0 // loop_exit
    _

</llo_original>
